<compile_context>
chip_gen: v6e
topology: v6e:2x2x1
jax: 0.10.0
libtpu: 0.0.40
codegen_flags: <defaults>
</compile_context>

<pallas_src>
import functools

import jax
import jax.numpy as jnp
from jax.experimental import pallas as pl
from jax.experimental.pallas import tpu as pltpu

LANE = 128


# ----------------------------------------------------------------------------
# Fused Pallas kernel: gather + LSTM recurrence + tied-weight projection
# ----------------------------------------------------------------------------
def fused_lstm_wt_kernel(tok_ref, table_ref, wih_t_ref, whh_t_ref, bias_ref,
                         bout_ref, out_ref, xproj_ref, hs_ref,
                         *, seq_len, batch, hidden):
    """tok_ref    : (T*B, 1)  int32  flattened tokens (time-major)
       table_ref  : (Vp, E)   f32    tied embedding table, V zero-padded to Vp
       wih_t_ref  : (E, 4H)   f32    W_ih^T
       whh_t_ref  : (H, 4H)   f32    W_hh^T
       bias_ref   : (1, 4H)   f32    b_ih + b_hh
       bout_ref   : (1, Vp)   f32    output bias, zero-padded
       out_ref    : (T*B, Vp) f32    logits (lane-dense)
       xproj_ref  : (T*B, 4H) f32    scratch: hoisted input projection
       hs_ref     : (T*B, H)  f32    scratch: hidden states of all steps"""
    T, B, H = seq_len, batch, hidden
    TB = T * B
    Vp = table_ref.shape[0]

    table = table_ref[...]                                    # (Vp, E), resident

    # 1) Embedding gather via one-hot matmul on the resident tied table.
    tok = tok_ref[...]                                        # (T*B, 1) int32
    lane_ids = jax.lax.broadcasted_iota(jnp.int32, (TB, Vp), 1)
    onehot = (lane_ids == tok).astype(jnp.float32)            # (T*B, Vp)
    emb = jnp.dot(onehot, table,
                  preferred_element_type=jnp.float32)         # (T*B, E)

    # 2) Hoisted input projection: one big MXU matmul, off the serial path.
    xproj_ref[...] = (jnp.dot(emb, wih_t_ref[...],
                              preferred_element_type=jnp.float32)
                      + bias_ref[...])                        # (T*B, 4H)

    whh_t = whh_t_ref[...]                                    # (H, 4H)

    # 3) Serial recurrence: per-step chain is one (B,H)@(H,4H) dot + gates.
    def step(t, carry):
        h, c = carry
        off = pl.multiple_of(t * B, B)
        gates = (xproj_ref[pl.ds(off, B), :]
                 + jnp.dot(h, whh_t, preferred_element_type=jnp.float32))
        # EUP work on the full (B, 4H) vreg; extract gate quarters after.
        sig = jax.nn.sigmoid(gates)
        tnh = jnp.tanh(gates)
        i_g = sig[:, 0 * H:1 * H]
        f_g = sig[:, 1 * H:2 * H]
        g_g = tnh[:, 2 * H:3 * H]
        o_g = sig[:, 3 * H:4 * H]
        c_new = f_g * c + i_g * g_g
        h_new = o_g * jnp.tanh(c_new)
        hs_ref[pl.ds(off, B), :] = h_new
        return (h_new, c_new)

    h0 = jnp.zeros((B, H), jnp.float32)
    c0 = jnp.zeros((B, H), jnp.float32)
    jax.lax.fori_loop(0, T, step, (h0, c0), unroll=True)

    # 4) Tied output head: reuse the resident table, contract on H (== E).
    logits = jax.lax.dot_general(
        hs_ref[...], table,
        dimension_numbers=(((1,), (1,)), ((), ())),
        preferred_element_type=jnp.float32)                   # (T*B, Vp)
    out_ref[...] = logits + bout_ref[...]


def fused_forward_pallas(tok2d, prep, *, seq_len, batch):
    """tok2d: (T*B, 1) int32; prep: one-time-prepared weight dict."""
    table_p = prep["table_p"]          # (Vp, E)
    wih_t = prep["w_ih_t"]             # (E, 4H)
    whh_t = prep["w_hh_t"]             # (H, 4H)
    bias = prep["bias"]                # (1, 4H)
    bout_p = prep["b_out_p"]           # (1, Vp)

    TB = seq_len * batch
    H = whh_t.shape[0]
    Vp = table_p.shape[0]

    kernel = functools.partial(fused_lstm_wt_kernel,
                               seq_len=seq_len, batch=batch, hidden=H)
    vmem_spec = pl.BlockSpec(memory_space=pltpu.MemorySpace.VMEM)

    return pl.pallas_call(
        kernel,
        out_shape=jax.ShapeDtypeStruct((TB, Vp), jnp.float32),
        in_specs=[vmem_spec] * 6,
        out_specs=vmem_spec,
        scratch_shapes=[pltpu.VMEM((TB, 4 * H), jnp.float32),   # x-projection
                        pltpu.VMEM((TB, H), jnp.float32)],      # hidden states
    )(tok2d, table_p, wih_t, whh_t, bias, bout_p)


# ----------------------------------------------------------------------------
# Full forward (only trivial layout glue lives outside the kernel), jitted
# ----------------------------------------------------------------------------
@functools.partial(jax.jit, static_argnames=("vocab_size",))
def lstm_wt_forward(tokens, prep, *, vocab_size):
    T0, T1 = tokens.shape
    tok2d = tokens.reshape(T0 * T1, 1).astype(jnp.int32)
    logits_p = fused_forward_pallas(tok2d, prep, seq_len=T0, batch=T1)
    logits = logits_p[:, :vocab_size].reshape(T0, T1, vocab_size)
    return jnp.transpose(logits, (0, 2, 1))                    # (T0, V, T1)


# ----------------------------------------------------------------------------
# One-time weight preparation (init-time, NOT per forward call)
# ----------------------------------------------------------------------------
def prepare_params(params):
    V, E = params["emb"].shape
    H = params["w_hh"].shape[1]
    # Weight tying through the LSTM requires hidden == embedding size.
    assert E == H, f"weight tying requires emb_size == hidden_size ({E} != {H})"
    Vp = max(LANE, -(-V // LANE) * LANE)                       # lane-dense pad
    table_p = jnp.zeros((Vp, E), jnp.float32).at[:V].set(params["emb"])
    bout_p = jnp.zeros((1, Vp), jnp.float32).at[0, :V].set(params["b_out"])
    return {
        "table_p": table_p,                                    # (Vp, E)
        "w_ih_t": jnp.transpose(params["w_ih"]),               # (E, 4H)
        "w_hh_t": jnp.transpose(params["w_hh"]),               # (H, 4H)
        "bias": (params["b_ih"] + params["b_hh"])[None, :],    # (1, 4H)
        "b_out_p": bout_p,                                     # (1, Vp)
    }


# ----------------------------------------------------------------------------
# Pure-JAX reference (for correctness check)
# ----------------------------------------------------------------------------
def reference_forward(tokens, params):
    emb_table = params["emb"]
    emb = emb_table[tokens]                # (T, B, E)
    H = params["w_hh"].shape[1]
    B = emb.shape[1]

    def step(carry, x_t):
        h, c = carry
        gates = (x_t @ params["w_ih"].T + h @ params["w_hh"].T
                 + params["b_ih"] + params["b_hh"])
        i, f, g, o = jnp.split(gates, 4, axis=-1)
        i = jax.nn.sigmoid(i)
        f = jax.nn.sigmoid(f)
        g = jnp.tanh(g)
        o = jax.nn.sigmoid(o)
        c = f * c + i * g
        h = o * jnp.tanh(c)
        return (h, c), h

    h0 = jnp.zeros((B, H), jnp.float32)
    c0 = jnp.zeros((B, H), jnp.float32)
    _, hs = jax.lax.scan(step, (h0, c0), emb)
    logits = hs @ emb_table.T + params["b_out"]   # weight tying
    return jnp.transpose(logits, (0, 2, 1))


# ----------------------------------------------------------------------------
# Deterministic parameter init (shapes match the PyTorch __init__, tied table)
# ----------------------------------------------------------------------------
def init_params(key, vocab_size, emb_size, pad_index=0):
    hidden_size = emb_size                 # nn.LSTM(emb_size, emb_size, ...)
    ks = jax.random.split(key, 8)
    bound = 1.0 / jnp.sqrt(hidden_size)
    emb = jax.random.normal(ks[0], (vocab_size, emb_size), jnp.float32)
    emb = emb.at[pad_index].set(0.0)       # padding_idx row = 0
    u = lambda k, s: jax.random.uniform(k, s, jnp.float32, -bound, bound)
    return {
        "emb":   emb,                                  # tied: output weight too
        "w_ih":  u(ks[1], (4 * hidden_size, emb_size)),
        "w_hh":  u(ks[2], (4 * hidden_size, hidden_size)),
        "b_ih":  u(ks[3], (4 * hidden_size,)),
        "b_hh":  u(ks[4], (4 * hidden_size,)),
        "b_out": u(ks[5], (vocab_size,)),
    }


if __name__ == "__main__":
    VOCAB = 64      # output_size
    EMB = 32        # emb_size (== LSTM hidden size, required by weight tying)
    T0, T1 = 4, 8   # input_sequence shape (dim0 = LSTM time, dim1 = batch)

    key = jax.random.PRNGKey(0)
    k_tok, k_par = jax.random.split(key)
    tokens = jax.random.randint(k_tok, (T0, T1), 0, VOCAB, dtype=jnp.int32)
    params = init_params(k_par, VOCAB, EMB, pad_index=0)
    prep = prepare_params(params)          # one-time weight prep (not per call)

    out = jax.block_until_ready(lstm_wt_forward(tokens, prep, vocab_size=VOCAB))
    ref = jax.block_until_ready(reference_forward(tokens, params))

    assert out.shape == (T0, VOCAB, T1), out.shape
    assert jnp.allclose(out, ref, atol=1e-4, rtol=1e-4), float(
        jnp.max(jnp.abs(out - ref)))

    print("KERNEL_OK")
</pallas_src>

<mosaic_0001>
module attributes {stable_mosaic.version = 11 : i64} {
  func.func @fused_lstm_wt_kernel(%arg0: memref<32x1xi32, #tpu.memory_space<vmem>>, %arg1: memref<128x32xf32, #tpu.memory_space<vmem>>, %arg2: memref<32x128xf32, #tpu.memory_space<vmem>>, %arg3: memref<32x128xf32, #tpu.memory_space<vmem>>, %arg4: memref<1x128xf32, #tpu.memory_space<vmem>>, %arg5: memref<1x128xf32, #tpu.memory_space<vmem>>, %arg6: memref<32x128xf32, #tpu.memory_space<vmem>>, %arg7: memref<32x128xf32, #tpu.memory_space<vmem>>, %arg8: memref<32x32xf32, #tpu.memory_space<vmem>>) attributes {dimension_semantics = [], scalar_prefetch = 0 : i64, scratch_operands = 2 : i64, tpu.core_type = #tpu.core_type<tc>} {
    %c0 = arith.constant 0 : index
    %c0_0 = arith.constant 0 : index
    %0 = vector.load %arg1[%c0, %c0_0] : memref<128x32xf32, #tpu.memory_space<vmem>>, vector<128x32xf32>
    %c0_1 = arith.constant 0 : index
    %c0_2 = arith.constant 0 : index
    %1 = vector.load %arg0[%c0_1, %c0_2] : memref<32x1xi32, #tpu.memory_space<vmem>>, vector<32x1xi32>
    %2 = tpu.iota {dimensions = array<i32: 1>} : vector<32x128xi32>
    %3 = vector.broadcast %1 : vector<32x1xi32> to vector<32x128xi32>
    %4 = arith.cmpi eq, %2, %3 : vector<32x128xi32>
    %5 = arith.extui %4 : vector<32x128xi1> to vector<32x128xi32>
    %6 = arith.sitofp %5 : vector<32x128xi32> to vector<32x128xf32>
    %cst = arith.constant dense<0.000000e+00> : vector<32x32xf32>
    %7 = tpu.matmul %6, %0, %cst {dimension_numbers = #tpu.dot_dimension_numbers<[1], [0], [0], [1], [0, 0, 1, 1], [], []>} : vector<32x128xf32>, vector<128x32xf32>, vector<32x32xf32> -> vector<32x32xf32>
    %c0_3 = arith.constant 0 : index
    %c0_4 = arith.constant 0 : index
    %8 = vector.load %arg2[%c0_3, %c0_4] : memref<32x128xf32, #tpu.memory_space<vmem>>, vector<32x128xf32>
    %cst_5 = arith.constant dense<0.000000e+00> : vector<32x128xf32>
    %9 = tpu.matmul %7, %8, %cst_5 {dimension_numbers = #tpu.dot_dimension_numbers<[1], [0], [0], [1], [0, 0, 1, 1], [], []>} : vector<32x32xf32>, vector<32x128xf32>, vector<32x128xf32> -> vector<32x128xf32>
    %c0_6 = arith.constant 0 : index
    %c0_7 = arith.constant 0 : index
    %10 = vector.load %arg4[%c0_6, %c0_7] : memref<1x128xf32, #tpu.memory_space<vmem>>, vector<1x128xf32>
    %11 = vector.broadcast %10 : vector<1x128xf32> to vector<32x128xf32>
    %12 = arith.addf %9, %11 : vector<32x128xf32>
    %c0_8 = arith.constant 0 : index
    %c0_9 = arith.constant 0 : index
    %13 = vector.load %arg7[%c0_8, %c0_9] : memref<32x128xf32, #tpu.memory_space<vmem>>, vector<32x128xf32>
    tpu.vector_store %arg7[%c0_8, %c0_9], %12 {strides = array<i32>} : memref<32x128xf32, #tpu.memory_space<vmem>>, vector<32x128xf32>,
    %c0_10 = arith.constant 0 : index
    %c0_11 = arith.constant 0 : index
    %14 = vector.load %arg3[%c0_10, %c0_11] : memref<32x128xf32, #tpu.memory_space<vmem>>, vector<32x128xf32>
    %cst_12 = arith.constant 0.000000e+00 : f32
    %15 = vector.broadcast %cst_12 : f32 to vector<8x32xf32>
    %cst_13 = arith.constant 0.000000e+00 : f32
    %16 = vector.broadcast %cst_13 : f32 to vector<8x32xf32>
    %c0_i32 = arith.constant 0 : i32
    %c8_i32 = arith.constant 8 : i32
    %17 = arith.muli %c0_i32, %c8_i32 : i32
    %18 = tpu.assume_multiple %17, 8 : i32
    %19 = arith.index_cast %18 : i32 to index
    %c0_14 = arith.constant 0 : index
    %20 = vector.load %arg7[%19, %c0_14] : memref<32x128xf32, #tpu.memory_space<vmem>>, vector<8x128xf32>
    %cst_15 = arith.constant dense<0.000000e+00> : vector<8x128xf32>
    %21 = tpu.matmul %15, %14, %cst_15 {dimension_numbers = #tpu.dot_dimension_numbers<[1], [0], [0], [1], [0, 0, 1, 1], [], []>} : vector<8x32xf32>, vector<32x128xf32>, vector<8x128xf32> -> vector<8x128xf32>
    %22 = arith.addf %20, %21 : vector<8x128xf32>
    %23 = arith.negf %22 : vector<8x128xf32>
    %24 = math.exp %23 : vector<8x128xf32>
    %cst_16 = arith.constant 1.000000e+00 : f32
    %25 = vector.broadcast %cst_16 : f32 to vector<8x128xf32>
    %26 = arith.addf %25, %24 : vector<8x128xf32>
    %27 = arith.divf %25, %26 : vector<8x128xf32>
    %28 = math.tanh %22 : vector<8x128xf32>
    %29 = vector.extract_strided_slice %27 {offsets = [0, 0], sizes = [8, 32], strides = [1, 1]} : vector<8x128xf32> to vector<8x32xf32>
    %30 = vector.extract_strided_slice %27 {offsets = [0, 32], sizes = [8, 32], strides = [1, 1]} : vector<8x128xf32> to vector<8x32xf32>
    %31 = vector.extract_strided_slice %28 {offsets = [0, 64], sizes = [8, 32], strides = [1, 1]} : vector<8x128xf32> to vector<8x32xf32>
    %32 = vector.extract_strided_slice %27 {offsets = [0, 96], sizes = [8, 32], strides = [1, 1]} : vector<8x128xf32> to vector<8x32xf32>
    %33 = arith.mulf %30, %16 : vector<8x32xf32>
    %34 = arith.mulf %29, %31 : vector<8x32xf32>
    %35 = arith.addf %33, %34 : vector<8x32xf32>
    %36 = math.tanh %35 : vector<8x32xf32>
    %37 = arith.mulf %32, %36 : vector<8x32xf32>
    %38 = arith.index_cast %18 : i32 to index
    %c0_17 = arith.constant 0 : index
    %39 = vector.load %arg8[%38, %c0_17] : memref<32x32xf32, #tpu.memory_space<vmem>>, vector<8x32xf32>
    tpu.vector_store %arg8[%38, %c0_17], %37 {strides = array<i32>} : memref<32x32xf32, #tpu.memory_space<vmem>>, vector<8x32xf32>,
    %c1_i32 = arith.constant 1 : i32
    %c8_i32_18 = arith.constant 8 : i32
    %40 = arith.muli %c1_i32, %c8_i32_18 : i32
    %41 = tpu.assume_multiple %40, 8 : i32
    %42 = arith.index_cast %41 : i32 to index
    %c0_19 = arith.constant 0 : index
    %43 = vector.load %arg7[%42, %c0_19] : memref<32x128xf32, #tpu.memory_space<vmem>>, vector<8x128xf32>
    %cst_20 = arith.constant dense<0.000000e+00> : vector<8x128xf32>
    %44 = tpu.matmul %37, %14, %cst_20 {dimension_numbers = #tpu.dot_dimension_numbers<[1], [0], [0], [1], [0, 0, 1, 1], [], []>} : vector<8x32xf32>, vector<32x128xf32>, vector<8x128xf32> -> vector<8x128xf32>
    %45 = arith.addf %43, %44 : vector<8x128xf32>
    %46 = arith.negf %45 : vector<8x128xf32>
    %47 = math.exp %46 : vector<8x128xf32>
    %cst_21 = arith.constant 1.000000e+00 : f32
    %48 = vector.broadcast %cst_21 : f32 to vector<8x128xf32>
    %49 = arith.addf %48, %47 : vector<8x128xf32>
    %50 = arith.divf %48, %49 : vector<8x128xf32>
    %51 = math.tanh %45 : vector<8x128xf32>
    %52 = vector.extract_strided_slice %50 {offsets = [0, 0], sizes = [8, 32], strides = [1, 1]} : vector<8x128xf32> to vector<8x32xf32>
    %53 = vector.extract_strided_slice %50 {offsets = [0, 32], sizes = [8, 32], strides = [1, 1]} : vector<8x128xf32> to vector<8x32xf32>
    %54 = vector.extract_strided_slice %51 {offsets = [0, 64], sizes = [8, 32], strides = [1, 1]} : vector<8x128xf32> to vector<8x32xf32>
    %55 = vector.extract_strided_slice %50 {offsets = [0, 96], sizes = [8, 32], strides = [1, 1]} : vector<8x128xf32> to vector<8x32xf32>
    %56 = arith.mulf %53, %35 : vector<8x32xf32>
    %57 = arith.mulf %52, %54 : vector<8x32xf32>
    %58 = arith.addf %56, %57 : vector<8x32xf32>
    %59 = math.tanh %58 : vector<8x32xf32>
    %60 = arith.mulf %55, %59 : vector<8x32xf32>
    %61 = arith.index_cast %41 : i32 to index
    %c0_22 = arith.constant 0 : index
    %62 = vector.load %arg8[%61, %c0_22] : memref<32x32xf32, #tpu.memory_space<vmem>>, vector<8x32xf32>
    tpu.vector_store %arg8[%61, %c0_22], %60 {strides = array<i32>} : memref<32x32xf32, #tpu.memory_space<vmem>>, vector<8x32xf32>,
    %c2_i32 = arith.constant 2 : i32
    %c8_i32_23 = arith.constant 8 : i32
    %63 = arith.muli %c2_i32, %c8_i32_23 : i32
    %64 = tpu.assume_multiple %63, 8 : i32
    %65 = arith.index_cast %64 : i32 to index
    %c0_24 = arith.constant 0 : index
    %66 = vector.load %arg7[%65, %c0_24] : memref<32x128xf32, #tpu.memory_space<vmem>>, vector<8x128xf32>
    %cst_25 = arith.constant dense<0.000000e+00> : vector<8x128xf32>
    %67 = tpu.matmul %60, %14, %cst_25 {dimension_numbers = #tpu.dot_dimension_numbers<[1], [0], [0], [1], [0, 0, 1, 1], [], []>} : vector<8x32xf32>, vector<32x128xf32>, vector<8x128xf32> -> vector<8x128xf32>
    %68 = arith.addf %66, %67 : vector<8x128xf32>
    %69 = arith.negf %68 : vector<8x128xf32>
    %70 = math.exp %69 : vector<8x128xf32>
    %cst_26 = arith.constant 1.000000e+00 : f32
    %71 = vector.broadcast %cst_26 : f32 to vector<8x128xf32>
    %72 = arith.addf %71, %70 : vector<8x128xf32>
    %73 = arith.divf %71, %72 : vector<8x128xf32>
    %74 = math.tanh %68 : vector<8x128xf32>
    %75 = vector.extract_strided_slice %73 {offsets = [0, 0], sizes = [8, 32], strides = [1, 1]} : vector<8x128xf32> to vector<8x32xf32>
    %76 = vector.extract_strided_slice %73 {offsets = [0, 32], sizes = [8, 32], strides = [1, 1]} : vector<8x128xf32> to vector<8x32xf32>
    %77 = vector.extract_strided_slice %74 {offsets = [0, 64], sizes = [8, 32], strides = [1, 1]} : vector<8x128xf32> to vector<8x32xf32>
    %78 = vector.extract_strided_slice %73 {offsets = [0, 96], sizes = [8, 32], strides = [1, 1]} : vector<8x128xf32> to vector<8x32xf32>
    %79 = arith.mulf %76, %58 : vector<8x32xf32>
    %80 = arith.mulf %75, %77 : vector<8x32xf32>
    %81 = arith.addf %79, %80 : vector<8x32xf32>
    %82 = math.tanh %81 : vector<8x32xf32>
    %83 = arith.mulf %78, %82 : vector<8x32xf32>
    %84 = arith.index_cast %64 : i32 to index
    %c0_27 = arith.constant 0 : index
    %85 = vector.load %arg8[%84, %c0_27] : memref<32x32xf32, #tpu.memory_space<vmem>>, vector<8x32xf32>
    tpu.vector_store %arg8[%84, %c0_27], %83 {strides = array<i32>} : memref<32x32xf32, #tpu.memory_space<vmem>>, vector<8x32xf32>,
    %c3_i32 = arith.constant 3 : i32
    %c8_i32_28 = arith.constant 8 : i32
    %86 = arith.muli %c3_i32, %c8_i32_28 : i32
    %87 = tpu.assume_multiple %86, 8 : i32
    %88 = arith.index_cast %87 : i32 to index
    %c0_29 = arith.constant 0 : index
    %89 = vector.load %arg7[%88, %c0_29] : memref<32x128xf32, #tpu.memory_space<vmem>>, vector<8x128xf32>
    %cst_30 = arith.constant dense<0.000000e+00> : vector<8x128xf32>
    %90 = tpu.matmul %83, %14, %cst_30 {dimension_numbers = #tpu.dot_dimension_numbers<[1], [0], [0], [1], [0, 0, 1, 1], [], []>} : vector<8x32xf32>, vector<32x128xf32>, vector<8x128xf32> -> vector<8x128xf32>
    %91 = arith.addf %89, %90 : vector<8x128xf32>
    %92 = arith.negf %91 : vector<8x128xf32>
    %93 = math.exp %92 : vector<8x128xf32>
    %cst_31 = arith.constant 1.000000e+00 : f32
    %94 = vector.broadcast %cst_31 : f32 to vector<8x128xf32>
    %95 = arith.addf %94, %93 : vector<8x128xf32>
    %96 = arith.divf %94, %95 : vector<8x128xf32>
    %97 = math.tanh %91 : vector<8x128xf32>
    %98 = vector.extract_strided_slice %96 {offsets = [0, 0], sizes = [8, 32], strides = [1, 1]} : vector<8x128xf32> to vector<8x32xf32>
    %99 = vector.extract_strided_slice %96 {offsets = [0, 32], sizes = [8, 32], strides = [1, 1]} : vector<8x128xf32> to vector<8x32xf32>
    %100 = vector.extract_strided_slice %97 {offsets = [0, 64], sizes = [8, 32], strides = [1, 1]} : vector<8x128xf32> to vector<8x32xf32>
    %101 = vector.extract_strided_slice %96 {offsets = [0, 96], sizes = [8, 32], strides = [1, 1]} : vector<8x128xf32> to vector<8x32xf32>
    %102 = arith.mulf %99, %81 : vector<8x32xf32>
    %103 = arith.mulf %98, %100 : vector<8x32xf32>
    %104 = arith.addf %102, %103 : vector<8x32xf32>
    %105 = math.tanh %104 : vector<8x32xf32>
    %106 = arith.mulf %101, %105 : vector<8x32xf32>
    %107 = arith.index_cast %87 : i32 to index
    %c0_32 = arith.constant 0 : index
    %108 = vector.load %arg8[%107, %c0_32] : memref<32x32xf32, #tpu.memory_space<vmem>>, vector<8x32xf32>
    tpu.vector_store %arg8[%107, %c0_32], %106 {strides = array<i32>} : memref<32x32xf32, #tpu.memory_space<vmem>>, vector<8x32xf32>,
    %c4_i32 = arith.constant 4 : i32
    %c0_33 = arith.constant 0 : index
    %c0_34 = arith.constant 0 : index
    %109 = vector.load %arg8[%c0_33, %c0_34] : memref<32x32xf32, #tpu.memory_space<vmem>>, vector<32x32xf32>
    %cst_35 = arith.constant dense<0.000000e+00> : vector<32x128xf32>
    %110 = tpu.matmul %109, %0, %cst_35 {dimension_numbers = #tpu.dot_dimension_numbers<[1], [1], [0], [0], [0, 0, 1, 0], [], []>} : vector<32x32xf32>, vector<128x32xf32>, vector<32x128xf32> -> vector<32x128xf32>
    %c0_36 = arith.constant 0 : index
    %c0_37 = arith.constant 0 : index
    %111 = vector.load %arg5[%c0_36, %c0_37] : memref<1x128xf32, #tpu.memory_space<vmem>>, vector<1x128xf32>
    %112 = vector.broadcast %111 : vector<1x128xf32> to vector<32x128xf32>
    %113 = arith.addf %110, %112 : vector<32x128xf32>
    %c0_38 = arith.constant 0 : index
    %c0_39 = arith.constant 0 : index
    %114 = vector.load %arg6[%c0_38, %c0_39] : memref<32x128xf32, #tpu.memory_space<vmem>>, vector<32x128xf32>
    tpu.vector_store %arg6[%c0_38, %c0_39], %113 {strides = array<i32>} : memref<32x128xf32, #tpu.memory_space<vmem>>, vector<32x128xf32>,
    return
  }
}

</mosaic_0001>

<llo_original>
// kernel: lstm_wt_forward.1
$region0: #{lstm_wt_forward.1}
  #allocation0 [shape = 'u32[]', space=smem, size = 0x4, offset = 0x4, fixed_abs, tag = 'smem constant byte address 0x4 - core index']
  #allocation1 [shape = 'u32[144,128]{1,0:T(1,128)}', space=vmem, size = 0x12000, scoped, tag = 'internal scratch']
  #allocation2 [shape = 'f32[32,128]{1,0:T(8,128)}', space=vmem, size = 0x4000, scoped, tag = 'scratch operand']
  #allocation3 [shape = 'f32[32,32]{1,0:T(8,128)}', space=vmem, size = 0x4000, scoped, tag = 'scratch operand']
  %s0 = inlined_call_operand.vmem [shape: s32[32,1], index: 0, kind: input, shape index: {}]
  %s1 = inlined_call_operand.vmem [shape: f32[128,32], index: 1, kind: input, shape index: {}]
  %s2 = inlined_call_operand.vmem [shape: f32[32,128], index: 2, kind: input, shape index: {}]
  %s3 = inlined_call_operand.vmem [shape: f32[32,128], index: 3, kind: input, shape index: {}]
  %s4 = inlined_call_operand.vmem [shape: f32[1,128], index: 4, kind: input, shape index: {}]
  %s5 = inlined_call_operand.vmem [shape: f32[1,128], index: 5, kind: input, shape index: {}]
  %s6 = inlined_call_operand.vmem [shape: f32[32,128], index: 6, kind: output, shape index: {}]
  %s7 = sld [smem:[#allocation0]]
  $region34: #{lstm_wt_forward.1} parent=0
    _
  %s9 = ssub.s32 1, %s7
  %s10 = scalar_select 0, %s9, %s7
  // Predicated region
  $region2: #{lstm_wt_forward.1} parent=0 // pred_check
    _
  $region3: #{lstm_wt_forward.1} parent=0 // pred_check_branch
    %12 = sbr.rel (0) target = $region5
  $region4: #{lstm_wt_forward.1} parent=0 // pred_region
    _
  $region5: #{lstm_wt_forward.1} parent=0 // pred_fallthru
    _
  // Predicated region
  $region6: #{lstm_wt_forward.1} parent=0 // pred_check
    _
  $region7: #{lstm_wt_forward.1} parent=0 // pred_check_branch
    %14 = sbr.rel (0) target = $region9
  $region8: #{lstm_wt_forward.1} parent=0 // pred_region
    _
  $region9: #{lstm_wt_forward.1} parent=0 // pred_fallthru
    _
  // Predicated region
  $region10: #{lstm_wt_forward.1} parent=0 // pred_check
    _
  $region11: #{lstm_wt_forward.1} parent=0 // pred_check_branch
    %16 = sbr.rel (0) target = $region13
  $region12: #{lstm_wt_forward.1} parent=0 // pred_region
    _
  $region13: #{lstm_wt_forward.1} parent=0 // pred_fallthru
    _
  // Predicated region
  $region14: #{lstm_wt_forward.1} parent=0 // pred_check
    _
  $region15: #{lstm_wt_forward.1} parent=0 // pred_check_branch
    %18 = sbr.rel (0) target = $region17
  $region16: #{lstm_wt_forward.1} parent=0 // pred_region
    _
  $region17: #{lstm_wt_forward.1} parent=0 // pred_fallthru
    _
  // Predicated region
  $region18: #{lstm_wt_forward.1} parent=0 // pred_check
    _
  $region19: #{lstm_wt_forward.1} parent=0 // pred_check_branch
    %20 = sbr.rel (0) target = $region21
  $region20: #{lstm_wt_forward.1} parent=0 // pred_region
    _
  $region21: #{lstm_wt_forward.1} parent=0 // pred_fallthru
    _
  // Predicated region
  $region22: #{lstm_wt_forward.1} parent=0 // pred_check
    _
  $region23: #{lstm_wt_forward.1} parent=0 // pred_check_branch
    %22 = sbr.rel (0) target = $region25
  $region24: #{lstm_wt_forward.1} parent=0 // pred_region
    _
  $region25: #{lstm_wt_forward.1} parent=0 // pred_fallthru
    _
  %v23 = vld [vmem:[%s1] sm:$0xff]
  %v24 = vld [vmem:[%s1 + $0x8] sm:$0xff]
  %v25 = vld [vmem:[%s1 + $0x10] sm:$0xff]
  %v26 = vld [vmem:[%s1 + $0x18] sm:$0xff]
  %v27 = vld [vmem:[%s1 + $0x20] sm:$0xff]
  %v28 = vld [vmem:[%s1 + $0x28] sm:$0xff]
  %v29 = vld [vmem:[%s1 + $0x30] sm:$0xff]
  %v30 = vld [vmem:[%s1 + $0x38] sm:$0xff]
  %v31 = vld [vmem:[%s1 + $0x40] sm:$0xff]
  %v32 = vld [vmem:[%s1 + $0x48] sm:$0xff]
  %v33 = vld [vmem:[%s1 + $0x50] sm:$0xff]
  %v34 = vld [vmem:[%s1 + $0x58] sm:$0xff]
  %v35 = vld [vmem:[%s1 + $0x60] sm:$0xff]
  %v36 = vld [vmem:[%s1 + $0x68] sm:$0xff]
  %v37 = vld [vmem:[%s1 + $0x70] sm:$0xff]
  %v38 = vld [vmem:[%s1 + $0x78] sm:$0xff]
  %v39 = vld [vmem:[%s0] sm:$0xff]
  %v40 = vld [vmem:[%s0 + $0x8] sm:$0xff]
  %v41 = vld [vmem:[%s0 + $0x10] sm:$0xff]
  %v42 = vld [vmem:[%s0 + $0x18] sm:$0xff]
  %v43 = vlaneseq
  %v44 = vand.u32 %v43, 127
  %45 = vset.pattern.permute.xlu0 0
  %46 = vperm.xlu0 %45, %v39
  %v47 = vpop.permute.xlu0 %46
  %48 = vset.pattern.permute.xlu0 0
  %49 = vperm.xlu0 %48, %v40
  %v50 = vpop.permute.xlu0 %49
  %51 = vset.pattern.permute.xlu0 0
  %52 = vperm.xlu0 %51, %v41
  %v53 = vpop.permute.xlu0 %52
  %54 = vset.pattern.permute.xlu0 0
  %55 = vperm.xlu0 %54, %v42
  %v56 = vpop.permute.xlu0 %55
  %vm57 = vcmp.eq.s32.totalorder %v44, %v47
  %vm58 = vcmp.eq.s32.totalorder %v44, %v50
  %vm59 = vcmp.eq.s32.totalorder %v44, %v53
  %vm60 = vcmp.eq.s32.totalorder %v44, %v56
  %v61 = vsel %vm57, 1, 0
  %v62 = vsel %vm58, 1, 0
  %v63 = vsel %vm59, 1, 0
  %v64 = vsel %vm60, 1, 0
  %v65 = vcvt.s32.f32 %v61
  %v66 = vcvt.s32.f32 %v62
  %v67 = vcvt.s32.f32 %v63
  %v68 = vcvt.s32.f32 %v64
  %69 = vmatprep.subr.mxu0 0.0
  %70 = vmatpush1.msra.mxu0 %v38
  %71 = vmatprep.subr.mxu0 0.0
  %72 = vmatpush1.msra.mxu0 %v37
  %73 = vmatprep.subr.mxu0 0.0
  %74 = vmatpush1.msra.mxu0 %v36
  %75 = vmatprep.subr.mxu0 0.0
  %76 = vmatpush1.msra.mxu0 %v35
  %77 = vmatprep.subr.mxu0 0.0
  %78 = vmatpush1.msra.mxu0 %v34
  %79 = vmatprep.subr.mxu0 0.0
  %80 = vmatpush1.msra.mxu0 %v33
  %81 = vmatprep.subr.mxu0 0.0
  %82 = vmatpush1.msra.mxu0 %v32
  %83 = vmatprep.subr.mxu0 0.0
  %84 = vmatpush1.msra.mxu0 %v31
  %85 = vmatprep.subr.mxu0 0.0
  %86 = vmatpush1.msra.mxu0 %v30
  %87 = vmatprep.subr.mxu0 0.0
  %88 = vmatpush1.msra.mxu0 %v29
  %89 = vmatprep.subr.mxu0 0.0
  %90 = vmatpush1.msra.mxu0 %v28
  %91 = vmatprep.subr.mxu0 0.0
  %92 = vmatpush1.msra.mxu0 %v27
  %93 = vmatprep.subr.mxu0 0.0
  %94 = vmatpush1.msra.mxu0 %v26
  %95 = vmatprep.subr.mxu0 0.0
  %96 = vmatpush1.msra.mxu0 %v25
  %97 = vmatprep.subr.mxu0 0.0
  %98 = vmatpush1.msra.mxu0 %v24
  %99 = vmatprep.subr.mxu0 0.0
  %100 = vmatpush1.msra.mxu0 %v23
  %101 = vmatprep.subr.mxu0 0.0
  %102 = vmatpush2.msra.mxu0 0.0
  %103 = vmatprep.subr.mxu0 0.0
  %104 = vmatpush2.msra.mxu0 0.0
  %105 = vmatprep.subr.mxu0 0.0
  %106 = vmatpush2.msra.mxu0 0.0
  %107 = vmatprep.subr.mxu0 0.0
  %108 = vmatpush2.msra.mxu0 0.0
  %109 = vmatprep.subr.mxu0 0.0
  %110 = vmatpush2.msra.mxu0 0.0
  %111 = vmatprep.subr.mxu0 0.0
  %112 = vmatpush2.msra.mxu0 0.0
  %113 = vmatprep.subr.mxu0 0.0
  %114 = vmatpush2.msra.mxu0 0.0
  %115 = vmatprep.subr.mxu0 0.0
  %116 = vmatpush2.msra.mxu0 0.0
  %117 = vmatprep.subr.mxu0 0.0
  %118 = vmatpush2.msra.mxu0 0.0
  %119 = vmatprep.subr.mxu0 0.0
  %120 = vmatpush2.msra.mxu0 0.0
  %121 = vmatprep.subr.mxu0 0.0
  %122 = vmatpush2.msra.mxu0 0.0
  %123 = vmatprep.subr.mxu0 0.0
  %124 = vmatpush2.msra.mxu0 0.0
  %125 = vmatprep.subr.mxu0 0.0
  %126 = vmatpush2.msra.mxu0 0.0
  %127 = vmatprep.subr.mxu0 0.0
  %128 = vmatpush2.msra.mxu0 0.0
  %129 = vmatprep.subr.mxu0 0.0
  %130 = vmatpush2.msra.mxu0 0.0
  %131 = vmatprep.subr.mxu0 0.0
  %132 = vmatpush2.msra.mxu0 0.0
  %133 = vmatprep.mubr.f32.mxu0 0.0
  %134 = vmatmul.mubr.f32.gmra.mxu0 %v65
  %v135 = vpop.f32.mrf.mxu0
  %v136 = vadd.f32 0.0, %v135
  %v137 = vpop.f32.mrf.mxu0
  %138 = vmatprep.mubr.f32.mxu0 0.0
  %139 = vmatmul.mubr.f32.gmra.mxu0 %v66
  %v140 = vpop.f32.mrf.mxu0
  %v141 = vadd.f32 0.0, %v140
  %v142 = vpop.f32.mrf.mxu0
  %143 = vmatprep.mubr.f32.mxu0 0.0
  %144 = vmatmul.mubr.f32.gmra.mxu0 %v67
  %v145 = vpop.f32.mrf.mxu0
  %v146 = vadd.f32 0.0, %v145
  %v147 = vpop.f32.mrf.mxu0
  %148 = vmatprep.mubr.f32.mxu0 0.0
  %149 = vmatmul.mubr.f32.gmra.mxu0 %v68
  %v150 = vpop.f32.mrf.mxu0
  %v151 = vadd.f32 0.0, %v150
  %v152 = vpop.f32.mrf.mxu0
  %153 = vdwg.mxu0
  %v154 = vld [vmem:[%s2] sm:$0xff]
  %v155 = vld [vmem:[%s2 + $0x8] sm:$0xff]
  %v156 = vld [vmem:[%s2 + $0x10] sm:$0xff]
  %v157 = vld [vmem:[%s2 + $0x18] sm:$0xff]
  %v158 = vld [vmem:[%s4] sm:$0x1]
  %v160 = vlaneseq
  %v161 = vshrl.u32 %v160, 7
  %v162 = vsub.s32 0, %v161
  %v163 = vrot.slane %v158, %v162
  %vm165 = vcmask 261120
  %v167 = vsel %vm165, %v136, 0
  %v170 = vsel %vm165, %v141, 0
  %v173 = vsel %vm165, %v146, 0
  %v176 = vsel %vm165, %v151, 0
  %178 = vmatprep.subr.mxu0 0.0
  %179 = vmatpush1.msra.mxu0 0.0
  %180 = vmatprep.subr.mxu0 0.0
  %181 = vmatpush1.msra.mxu0 0.0
  %182 = vmatprep.subr.mxu0 0.0
  %183 = vmatpush1.msra.mxu0 0.0
  %184 = vmatprep.subr.mxu0 0.0
  %185 = vmatpush1.msra.mxu0 0.0
  %186 = vmatprep.subr.mxu0 0.0
  %187 = vmatpush1.msra.mxu0 0.0
  %188 = vmatprep.subr.mxu0 0.0
  %189 = vmatpush1.msra.mxu0 0.0
  %190 = vmatprep.subr.mxu0 0.0
  %191 = vmatpush1.msra.mxu0 0.0
  %192 = vmatprep.subr.mxu0 0.0
  %193 = vmatpush1.msra.mxu0 0.0
  %194 = vmatprep.subr.mxu0 0.0
  %195 = vmatpush1.msra.mxu0 0.0
  %196 = vmatprep.subr.mxu0 0.0
  %197 = vmatpush1.msra.mxu0 0.0
  %198 = vmatprep.subr.mxu0 0.0
  %199 = vmatpush1.msra.mxu0 0.0
  %200 = vmatprep.subr.mxu0 0.0
  %201 = vmatpush1.msra.mxu0 0.0
  %202 = vmatprep.subr.mxu0 0.0
  %203 = vmatpush1.msra.mxu0 %v157
  %204 = vmatprep.subr.mxu0 0.0
  %205 = vmatpush1.msra.mxu0 %v156
  %206 = vmatprep.subr.mxu0 0.0
  %207 = vmatpush1.msra.mxu0 %v155
  %208 = vmatprep.subr.mxu0 0.0
  %209 = vmatpush1.msra.mxu0 %v154
  %210 = vmatprep.subr.mxu0 0.0
  %211 = vmatpush2.msra.mxu0 0.0
  %212 = vmatprep.subr.mxu0 0.0
  %213 = vmatpush2.msra.mxu0 0.0
  %214 = vmatprep.subr.mxu0 0.0
  %215 = vmatpush2.msra.mxu0 0.0
  %216 = vmatprep.subr.mxu0 0.0
  %217 = vmatpush2.msra.mxu0 0.0
  %218 = vmatprep.subr.mxu0 0.0
  %219 = vmatpush2.msra.mxu0 0.0
  %220 = vmatprep.subr.mxu0 0.0
  %221 = vmatpush2.msra.mxu0 0.0
  %222 = vmatprep.subr.mxu0 0.0
  %223 = vmatpush2.msra.mxu0 0.0
  %224 = vmatprep.subr.mxu0 0.0
  %225 = vmatpush2.msra.mxu0 0.0
  %226 = vmatprep.subr.mxu0 0.0
  %227 = vmatpush2.msra.mxu0 0.0
  %228 = vmatprep.subr.mxu0 0.0
  %229 = vmatpush2.msra.mxu0 0.0
  %230 = vmatprep.subr.mxu0 0.0
  %231 = vmatpush2.msra.mxu0 0.0
  %232 = vmatprep.subr.mxu0 0.0
  %233 = vmatpush2.msra.mxu0 0.0
  %234 = vmatprep.subr.mxu0 0.0
  %235 = vmatpush2.msra.mxu0 0.0
  %236 = vmatprep.subr.mxu0 0.0
  %237 = vmatpush2.msra.mxu0 0.0
  %238 = vmatprep.subr.mxu0 0.0
  %239 = vmatpush2.msra.mxu0 0.0
  %240 = vmatprep.subr.mxu0 0.0
  %241 = vmatpush2.msra.mxu0 0.0
  %242 = vmatprep.mubr.f32.mxu0 0.0
  %243 = vmatmul.mubr.f32.gmra.mxu0 %v167
  %v244 = vpop.f32.mrf.mxu0
  %v245 = vadd.f32 %v163, %v244
  %v246 = vpop.f32.mrf.mxu0
  %247 = vmatprep.mubr.f32.mxu0 0.0
  %248 = vmatmul.mubr.f32.gmra.mxu0 %v170
  %v249 = vpop.f32.mrf.mxu0
  %v250 = vadd.f32 %v163, %v249
  %v251 = vpop.f32.mrf.mxu0
  %252 = vmatprep.mubr.f32.mxu0 0.0
  %253 = vmatmul.mubr.f32.gmra.mxu0 %v173
  %v254 = vpop.f32.mrf.mxu0
  %v255 = vadd.f32 %v163, %v254
  %v256 = vpop.f32.mrf.mxu0
  %257 = vmatprep.mubr.f32.mxu0 0.0
  %258 = vmatmul.mubr.f32.gmra.mxu0 %v176
  %v259 = vpop.f32.mrf.mxu0
  %v260 = vadd.f32 %v163, %v259
  %v261 = vpop.f32.mrf.mxu0
  %262 = vdwg.mxu0
  %263 = vst [vmem:[#allocation2] sm:$0xff] %v245
  %264 = vst [vmem:[#allocation2 + $0x8] sm:$0xff] %v250
  %265 = vst [vmem:[#allocation2 + $0x10] sm:$0xff] %v255
  %266 = vst [vmem:[#allocation2 + $0x18] sm:$0xff] %v260
  %v267 = vld [vmem:[%s3] sm:$0xff]
  %v268 = vld [vmem:[%s3 + $0x8] sm:$0xff]
  %v269 = vld [vmem:[%s3 + $0x10] sm:$0xff]
  %v270 = vld [vmem:[%s3 + $0x18] sm:$0xff]
  %v271 = vld [vmem:[#allocation2] sm:$0xff]
  %v273 = vsel %vm165, 0.0, 0
  %275 = vmatprep.subr.mxu0 0.0
  %276 = vmatpush1.msra.mxu0 0.0
  %277 = vmatprep.subr.mxu0 0.0
  %278 = vmatpush1.msra.mxu0 0.0
  %279 = vmatprep.subr.mxu0 0.0
  %280 = vmatpush1.msra.mxu0 0.0
  %281 = vmatprep.subr.mxu0 0.0
  %282 = vmatpush1.msra.mxu0 0.0
  %283 = vmatprep.subr.mxu0 0.0
  %284 = vmatpush1.msra.mxu0 0.0
  %285 = vmatprep.subr.mxu0 0.0
  %286 = vmatpush1.msra.mxu0 0.0
  %287 = vmatprep.subr.mxu0 0.0
  %288 = vmatpush1.msra.mxu0 0.0
  %289 = vmatprep.subr.mxu0 0.0
  %290 = vmatpush1.msra.mxu0 0.0
  %291 = vmatprep.subr.mxu0 0.0
  %292 = vmatpush1.msra.mxu0 0.0
  %293 = vmatprep.subr.mxu0 0.0
  %294 = vmatpush1.msra.mxu0 0.0
  %295 = vmatprep.subr.mxu0 0.0
  %296 = vmatpush1.msra.mxu0 0.0
  %297 = vmatprep.subr.mxu0 0.0
  %298 = vmatpush1.msra.mxu0 0.0
  %299 = vmatprep.subr.mxu0 0.0
  %300 = vmatpush1.msra.mxu0 %v270
  %301 = vmatprep.subr.mxu0 0.0
  %302 = vmatpush1.msra.mxu0 %v269
  %303 = vmatprep.subr.mxu0 0.0
  %304 = vmatpush1.msra.mxu0 %v268
  %305 = vmatprep.subr.mxu0 0.0
  %306 = vmatpush1.msra.mxu0 %v267
  %307 = vmatprep.subr.mxu0 0.0
  %308 = vmatpush2.msra.mxu0 0.0
  %309 = vmatprep.subr.mxu0 0.0
  %310 = vmatpush2.msra.mxu0 0.0
  %311 = vmatprep.subr.mxu0 0.0
  %312 = vmatpush2.msra.mxu0 0.0
  %313 = vmatprep.subr.mxu0 0.0
  %314 = vmatpush2.msra.mxu0 0.0
  %315 = vmatprep.subr.mxu0 0.0
  %316 = vmatpush2.msra.mxu0 0.0
  %317 = vmatprep.subr.mxu0 0.0
  %318 = vmatpush2.msra.mxu0 0.0
  %319 = vmatprep.subr.mxu0 0.0
  %320 = vmatpush2.msra.mxu0 0.0
  %321 = vmatprep.subr.mxu0 0.0
  %322 = vmatpush2.msra.mxu0 0.0
  %323 = vmatprep.subr.mxu0 0.0
  %324 = vmatpush2.msra.mxu0 0.0
  %325 = vmatprep.subr.mxu0 0.0
  %326 = vmatpush2.msra.mxu0 0.0
  %327 = vmatprep.subr.mxu0 0.0
  %328 = vmatpush2.msra.mxu0 0.0
  %329 = vmatprep.subr.mxu0 0.0
  %330 = vmatpush2.msra.mxu0 0.0
  %331 = vmatprep.subr.mxu0 0.0
  %332 = vmatpush2.msra.mxu0 0.0
  %333 = vmatprep.subr.mxu0 0.0
  %334 = vmatpush2.msra.mxu0 0.0
  %335 = vmatprep.subr.mxu0 0.0
  %336 = vmatpush2.msra.mxu0 0.0
  %337 = vmatprep.subr.mxu0 0.0
  %338 = vmatpush2.msra.mxu0 0.0
  %339 = vmatprep.mubr.f32.mxu0 0.0
  %340 = vmatmul.mubr.f32.gmra.mxu0 %v273
  %v341 = vpop.f32.mrf.mxu0
  %v342 = vadd.f32 0.0, %v341
  %v343 = vpop.f32.mrf.mxu0
  %344 = vdwg.mxu0
  %v345 = vadd.f32 %v271, %v342
  %v346 = vxor.u32 %v345, 2147483648
  %v347 = vmul.f32 %v346, 1.442695
  %v348 = vpow.pop %v347
  %v349 = vadd.f32 %v348, 1.0
  %v350 = vrcp.pop %v349
  %v351 = vmul.f32 1.0, %v350
  %v352 = vtanh.pop %v345
  %v353 = vmul.f32 %v351, 0.0
  %355 = vrot.lane.b32.xlu0 %v352, 64
  %v356 = vpop.permute.xlu0 %355
  %v358 = vmul.f32 %v351, %v356
  %360 = vrot.lane.b32.xlu0 %v358, 32
  %v361 = vpop.permute.xlu0 %360
  %v363 = vadd.f32 %v353, %v361
  %v364 = vtanh.pop %v363
  %366 = vrot.lane.b32.xlu0 %v364, 64
  %v367 = vpop.permute.xlu0 %366
  %v369 = vmul.f32 %v351, %v367
  %371 = vrot.lane.b32.xlu0 %v369, 32
  %v372 = vpop.permute.xlu0 %371
  %374 = vst.msk [vmem:[#allocation3] sm:$0xff] %vm165, %v372
  %s375 = scalar_lea.vmem [#allocation2], 8
  %v376 = vld [vmem:[%s375] sm:$0xff]
  %v377 = vsel %vm165, %v372, 0
  %379 = vmatprep.subr.mxu0 0.0
  %380 = vmatpush1.msra.mxu0 0.0
  %381 = vmatprep.subr.mxu0 0.0
  %382 = vmatpush1.msra.mxu0 0.0
  %383 = vmatprep.subr.mxu0 0.0
  %384 = vmatpush1.msra.mxu0 0.0
  %385 = vmatprep.subr.mxu0 0.0
  %386 = vmatpush1.msra.mxu0 0.0
  %387 = vmatprep.subr.mxu0 0.0
  %388 = vmatpush1.msra.mxu0 0.0
  %389 = vmatprep.subr.mxu0 0.0
  %390 = vmatpush1.msra.mxu0 0.0
  %391 = vmatprep.subr.mxu0 0.0
  %392 = vmatpush1.msra.mxu0 0.0
  %393 = vmatprep.subr.mxu0 0.0
  %394 = vmatpush1.msra.mxu0 0.0
  %395 = vmatprep.subr.mxu0 0.0
  %396 = vmatpush1.msra.mxu0 0.0
  %397 = vmatprep.subr.mxu0 0.0
  %398 = vmatpush1.msra.mxu0 0.0
  %399 = vmatprep.subr.mxu0 0.0
  %400 = vmatpush1.msra.mxu0 0.0
  %401 = vmatprep.subr.mxu0 0.0
  %402 = vmatpush1.msra.mxu0 0.0
  %403 = vmatprep.subr.mxu0 0.0
  %404 = vmatpush1.msra.mxu0 %v270
  %405 = vmatprep.subr.mxu0 0.0
  %406 = vmatpush1.msra.mxu0 %v269
  %407 = vmatprep.subr.mxu0 0.0
  %408 = vmatpush1.msra.mxu0 %v268
  %409 = vmatprep.subr.mxu0 0.0
  %410 = vmatpush1.msra.mxu0 %v267
  %411 = vmatprep.subr.mxu0 0.0
  %412 = vmatpush2.msra.mxu0 0.0
  %413 = vmatprep.subr.mxu0 0.0
  %414 = vmatpush2.msra.mxu0 0.0
  %415 = vmatprep.subr.mxu0 0.0
  %416 = vmatpush2.msra.mxu0 0.0
  %417 = vmatprep.subr.mxu0 0.0
  %418 = vmatpush2.msra.mxu0 0.0
  %419 = vmatprep.subr.mxu0 0.0
  %420 = vmatpush2.msra.mxu0 0.0
  %421 = vmatprep.subr.mxu0 0.0
  %422 = vmatpush2.msra.mxu0 0.0
  %423 = vmatprep.subr.mxu0 0.0
  %424 = vmatpush2.msra.mxu0 0.0
  %425 = vmatprep.subr.mxu0 0.0
  %426 = vmatpush2.msra.mxu0 0.0
  %427 = vmatprep.subr.mxu0 0.0
  %428 = vmatpush2.msra.mxu0 0.0
  %429 = vmatprep.subr.mxu0 0.0
  %430 = vmatpush2.msra.mxu0 0.0
  %431 = vmatprep.subr.mxu0 0.0
  %432 = vmatpush2.msra.mxu0 0.0
  %433 = vmatprep.subr.mxu0 0.0
  %434 = vmatpush2.msra.mxu0 0.0
  %435 = vmatprep.subr.mxu0 0.0
  %436 = vmatpush2.msra.mxu0 0.0
  %437 = vmatprep.subr.mxu0 0.0
  %438 = vmatpush2.msra.mxu0 0.0
  %439 = vmatprep.subr.mxu0 0.0
  %440 = vmatpush2.msra.mxu0 0.0
  %441 = vmatprep.subr.mxu0 0.0
  %442 = vmatpush2.msra.mxu0 0.0
  %443 = vmatprep.mubr.f32.mxu0 0.0
  %444 = vmatmul.mubr.f32.gmra.mxu0 %v377
  %v445 = vpop.f32.mrf.mxu0
  %v446 = vadd.f32 0.0, %v445
  %v447 = vpop.f32.mrf.mxu0
  %448 = vdwg.mxu0
  %v449 = vadd.f32 %v376, %v446
  %v450 = vxor.u32 %v449, 2147483648
  %v451 = vmul.f32 %v450, 1.442695
  %v452 = vpow.pop %v451
  %v453 = vadd.f32 %v452, 1.0
  %v454 = vrcp.pop %v453
  %v455 = vmul.f32 1.0, %v454
  %v456 = vtanh.pop %v449
  %v457 = vmul.f32 %v455, %v363
  %459 = vrot.lane.b32.xlu0 %v456, 64
  %v460 = vpop.permute.xlu0 %459
  %v462 = vmul.f32 %v455, %v460
  %464 = vrot.lane.b32.xlu0 %v462, 32
  %v465 = vpop.permute.xlu0 %464
  %v467 = vadd.f32 %v457, %v465
  %v468 = vtanh.pop %v467
  %470 = vrot.lane.b32.xlu0 %v468, 64
  %v471 = vpop.permute.xlu0 %470
  %v473 = vmul.f32 %v455, %v471
  %475 = vrot.lane.b32.xlu0 %v473, 32
  %v476 = vpop.permute.xlu0 %475
  %s478 = scalar_lea.vmem [#allocation3], 8
  %479 = vst.msk [vmem:[%s478] sm:$0xff] %vm165, %v476
  %s480 = scalar_lea.vmem [#allocation2], 16
  %v481 = vld [vmem:[%s480] sm:$0xff]
  %v482 = vsel %vm165, %v476, 0
  %484 = vmatprep.subr.mxu0 0.0
  %485 = vmatpush1.msra.mxu0 0.0
  %486 = vmatprep.subr.mxu0 0.0
  %487 = vmatpush1.msra.mxu0 0.0
  %488 = vmatprep.subr.mxu0 0.0
  %489 = vmatpush1.msra.mxu0 0.0
  %490 = vmatprep.subr.mxu0 0.0
  %491 = vmatpush1.msra.mxu0 0.0
  %492 = vmatprep.subr.mxu0 0.0
  %493 = vmatpush1.msra.mxu0 0.0
  %494 = vmatprep.subr.mxu0 0.0
  %495 = vmatpush1.msra.mxu0 0.0
  %496 = vmatprep.subr.mxu0 0.0
  %497 = vmatpush1.msra.mxu0 0.0
  %498 = vmatprep.subr.mxu0 0.0
  %499 = vmatpush1.msra.mxu0 0.0
  %500 = vmatprep.subr.mxu0 0.0
  %501 = vmatpush1.msra.mxu0 0.0
  %502 = vmatprep.subr.mxu0 0.0
  %503 = vmatpush1.msra.mxu0 0.0
  %504 = vmatprep.subr.mxu0 0.0
  %505 = vmatpush1.msra.mxu0 0.0
  %506 = vmatprep.subr.mxu0 0.0
  %507 = vmatpush1.msra.mxu0 0.0
  %508 = vmatprep.subr.mxu0 0.0
  %509 = vmatpush1.msra.mxu0 %v270
  %510 = vmatprep.subr.mxu0 0.0
  %511 = vmatpush1.msra.mxu0 %v269
  %512 = vmatprep.subr.mxu0 0.0
  %513 = vmatpush1.msra.mxu0 %v268
  %514 = vmatprep.subr.mxu0 0.0
  %515 = vmatpush1.msra.mxu0 %v267
  %516 = vmatprep.subr.mxu0 0.0
  %517 = vmatpush2.msra.mxu0 0.0
  %518 = vmatprep.subr.mxu0 0.0
  %519 = vmatpush2.msra.mxu0 0.0
  %520 = vmatprep.subr.mxu0 0.0
  %521 = vmatpush2.msra.mxu0 0.0
  %522 = vmatprep.subr.mxu0 0.0
  %523 = vmatpush2.msra.mxu0 0.0
  %524 = vmatprep.subr.mxu0 0.0
  %525 = vmatpush2.msra.mxu0 0.0
  %526 = vmatprep.subr.mxu0 0.0
  %527 = vmatpush2.msra.mxu0 0.0
  %528 = vmatprep.subr.mxu0 0.0
  %529 = vmatpush2.msra.mxu0 0.0
  %530 = vmatprep.subr.mxu0 0.0
  %531 = vmatpush2.msra.mxu0 0.0
  %532 = vmatprep.subr.mxu0 0.0
  %533 = vmatpush2.msra.mxu0 0.0
  %534 = vmatprep.subr.mxu0 0.0
  %535 = vmatpush2.msra.mxu0 0.0
  %536 = vmatprep.subr.mxu0 0.0
  %537 = vmatpush2.msra.mxu0 0.0
  %538 = vmatprep.subr.mxu0 0.0
  %539 = vmatpush2.msra.mxu0 0.0
  %540 = vmatprep.subr.mxu0 0.0
  %541 = vmatpush2.msra.mxu0 0.0
  %542 = vmatprep.subr.mxu0 0.0
  %543 = vmatpush2.msra.mxu0 0.0
  %544 = vmatprep.subr.mxu0 0.0
  %545 = vmatpush2.msra.mxu0 0.0
  %546 = vmatprep.subr.mxu0 0.0
  %547 = vmatpush2.msra.mxu0 0.0
  %548 = vmatprep.mubr.f32.mxu0 0.0
  %549 = vmatmul.mubr.f32.gmra.mxu0 %v482
  %v550 = vpop.f32.mrf.mxu0
  %v551 = vadd.f32 0.0, %v550
  %v552 = vpop.f32.mrf.mxu0
  %553 = vdwg.mxu0
  %v554 = vadd.f32 %v481, %v551
  %v555 = vxor.u32 %v554, 2147483648
  %v556 = vmul.f32 %v555, 1.442695
  %v557 = vpow.pop %v556
  %v558 = vadd.f32 %v557, 1.0
  %v559 = vrcp.pop %v558
  %v560 = vmul.f32 1.0, %v559
  %v561 = vtanh.pop %v554
  %v562 = vmul.f32 %v560, %v467
  %564 = vrot.lane.b32.xlu0 %v561, 64
  %v565 = vpop.permute.xlu0 %564
  %v567 = vmul.f32 %v560, %v565
  %569 = vrot.lane.b32.xlu0 %v567, 32
  %v570 = vpop.permute.xlu0 %569
  %v572 = vadd.f32 %v562, %v570
  %v573 = vtanh.pop %v572
  %575 = vrot.lane.b32.xlu0 %v573, 64
  %v576 = vpop.permute.xlu0 %575
  %v578 = vmul.f32 %v560, %v576
  %580 = vrot.lane.b32.xlu0 %v578, 32
  %v581 = vpop.permute.xlu0 %580
  %s583 = scalar_lea.vmem [#allocation3], 16
  %584 = vst.msk [vmem:[%s583] sm:$0xff] %vm165, %v581
  %s585 = scalar_lea.vmem [#allocation2], 24
  %v586 = vld [vmem:[%s585] sm:$0xff]
  %v587 = vsel %vm165, %v581, 0
  %589 = vmatprep.subr.mxu0 0.0
  %590 = vmatpush1.msra.mxu0 0.0
  %591 = vmatprep.subr.mxu0 0.0
  %592 = vmatpush1.msra.mxu0 0.0
  %593 = vmatprep.subr.mxu0 0.0
  %594 = vmatpush1.msra.mxu0 0.0
  %595 = vmatprep.subr.mxu0 0.0
  %596 = vmatpush1.msra.mxu0 0.0
  %597 = vmatprep.subr.mxu0 0.0
  %598 = vmatpush1.msra.mxu0 0.0
  %599 = vmatprep.subr.mxu0 0.0
  %600 = vmatpush1.msra.mxu0 0.0
  %601 = vmatprep.subr.mxu0 0.0
  %602 = vmatpush1.msra.mxu0 0.0
  %603 = vmatprep.subr.mxu0 0.0
  %604 = vmatpush1.msra.mxu0 0.0
  %605 = vmatprep.subr.mxu0 0.0
  %606 = vmatpush1.msra.mxu0 0.0
  %607 = vmatprep.subr.mxu0 0.0
  %608 = vmatpush1.msra.mxu0 0.0
  %609 = vmatprep.subr.mxu0 0.0
  %610 = vmatpush1.msra.mxu0 0.0
  %611 = vmatprep.subr.mxu0 0.0
  %612 = vmatpush1.msra.mxu0 0.0
  %613 = vmatprep.subr.mxu0 0.0
  %614 = vmatpush1.msra.mxu0 %v270
  %615 = vmatprep.subr.mxu0 0.0
  %616 = vmatpush1.msra.mxu0 %v269
  %617 = vmatprep.subr.mxu0 0.0
  %618 = vmatpush1.msra.mxu0 %v268
  %619 = vmatprep.subr.mxu0 0.0
  %620 = vmatpush1.msra.mxu0 %v267
  %621 = vmatprep.subr.mxu0 0.0
  %622 = vmatpush2.msra.mxu0 0.0
  %623 = vmatprep.subr.mxu0 0.0
  %624 = vmatpush2.msra.mxu0 0.0
  %625 = vmatprep.subr.mxu0 0.0
  %626 = vmatpush2.msra.mxu0 0.0
  %627 = vmatprep.subr.mxu0 0.0
  %628 = vmatpush2.msra.mxu0 0.0
  %629 = vmatprep.subr.mxu0 0.0
  %630 = vmatpush2.msra.mxu0 0.0
  %631 = vmatprep.subr.mxu0 0.0
  %632 = vmatpush2.msra.mxu0 0.0
  %633 = vmatprep.subr.mxu0 0.0
  %634 = vmatpush2.msra.mxu0 0.0
  %635 = vmatprep.subr.mxu0 0.0
  %636 = vmatpush2.msra.mxu0 0.0
  %637 = vmatprep.subr.mxu0 0.0
  %638 = vmatpush2.msra.mxu0 0.0
  %639 = vmatprep.subr.mxu0 0.0
  %640 = vmatpush2.msra.mxu0 0.0
  %641 = vmatprep.subr.mxu0 0.0
  %642 = vmatpush2.msra.mxu0 0.0
  %643 = vmatprep.subr.mxu0 0.0
  %644 = vmatpush2.msra.mxu0 0.0
  %645 = vmatprep.subr.mxu0 0.0
  %646 = vmatpush2.msra.mxu0 0.0
  %647 = vmatprep.subr.mxu0 0.0
  %648 = vmatpush2.msra.mxu0 0.0
  %649 = vmatprep.subr.mxu0 0.0
  %650 = vmatpush2.msra.mxu0 0.0
  %651 = vmatprep.subr.mxu0 0.0
  %652 = vmatpush2.msra.mxu0 0.0
  %653 = vmatprep.mubr.f32.mxu0 0.0
  %654 = vmatmul.mubr.f32.gmra.mxu0 %v587
  %v655 = vpop.f32.mrf.mxu0
  %v656 = vadd.f32 0.0, %v655
  %v657 = vpop.f32.mrf.mxu0
  %658 = vdwg.mxu0
  %v659 = vadd.f32 %v586, %v656
  %v660 = vxor.u32 %v659, 2147483648
  %v661 = vmul.f32 %v660, 1.442695
  %v662 = vpow.pop %v661
  %v663 = vadd.f32 %v662, 1.0
  %v664 = vrcp.pop %v663
  %v665 = vmul.f32 1.0, %v664
  %v666 = vtanh.pop %v659
  %v667 = vmul.f32 %v665, %v572
  %669 = vrot.lane.b32.xlu0 %v666, 64
  %v670 = vpop.permute.xlu0 %669
  %v672 = vmul.f32 %v665, %v670
  %674 = vrot.lane.b32.xlu0 %v672, 32
  %v675 = vpop.permute.xlu0 %674
  %v677 = vadd.f32 %v667, %v675
  %v678 = vtanh.pop %v677
  %680 = vrot.lane.b32.xlu0 %v678, 64
  %v681 = vpop.permute.xlu0 %680
  %v683 = vmul.f32 %v665, %v681
  %685 = vrot.lane.b32.xlu0 %v683, 32
  %v686 = vpop.permute.xlu0 %685
  %s688 = scalar_lea.vmem [#allocation3], 24
  %689 = vst.msk [vmem:[%s688] sm:$0xff] %vm165, %v686
  %v690 = vld [vmem:[#allocation3] sm:$0xff]
  %v691 = vld [vmem:[#allocation3 + $0x8] sm:$0xff]
  %v692 = vld [vmem:[#allocation3 + $0x10] sm:$0xff]
  %v693 = vld [vmem:[#allocation3 + $0x18] sm:$0xff]
  %v694 = vld [vmem:[%s5] sm:$0x1]
  %v696 = vlaneseq
  %v697 = vshrl.u32 %v696, 7
  %v698 = vsub.s32 0, %v697
  %v699 = vrot.slane %v694, %v698
  %v702 = vsel %vm165, %v690, 0
  %v705 = vsel %vm165, %v691, 0
  %v708 = vsel %vm165, %v692, 0
  %v711 = vsel %vm165, %v693, 0
  %v714 = vsel %vm165, %v23, 0
  %v717 = vsel %vm165, %v24, 0
  %v720 = vsel %vm165, %v25, 0
  %v723 = vsel %vm165, %v26, 0
  %v726 = vsel %vm165, %v27, 0
  %v729 = vsel %vm165, %v28, 0
  %v732 = vsel %vm165, %v29, 0
  %v735 = vsel %vm165, %v30, 0
  %v738 = vsel %vm165, %v31, 0
  %v741 = vsel %vm165, %v32, 0
  %v744 = vsel %vm165, %v33, 0
  %v747 = vsel %vm165, %v34, 0
  %v750 = vsel %vm165, %v35, 0
  %v753 = vsel %vm165, %v36, 0
  %v756 = vsel %vm165, %v37, 0
  %v759 = vsel %vm165, %v38, 0
  %761 = vmatprep.subr.mxu0 0.0
  %762 = vmatpush1.xpose.msra.mxu0 %v759
  %763 = vmatprep.subr.mxu0 0.0
  %764 = vmatpush1.xpose.msra.mxu0 %v756
  %765 = vmatprep.subr.mxu0 0.0
  %766 = vmatpush1.xpose.msra.mxu0 %v753
  %767 = vmatprep.subr.mxu0 0.0
  %768 = vmatpush1.xpose.msra.mxu0 %v750
  %769 = vmatprep.subr.mxu0 0.0
  %770 = vmatpush1.xpose.msra.mxu0 %v747
  %771 = vmatprep.subr.mxu0 0.0
  %772 = vmatpush1.xpose.msra.mxu0 %v744
  %773 = vmatprep.subr.mxu0 0.0
  %774 = vmatpush1.xpose.msra.mxu0 %v741
  %775 = vmatprep.subr.mxu0 0.0
  %776 = vmatpush1.xpose.msra.mxu0 %v738
  %777 = vmatprep.subr.mxu0 0.0
  %778 = vmatpush1.xpose.msra.mxu0 %v735
  %779 = vmatprep.subr.mxu0 0.0
  %780 = vmatpush1.xpose.msra.mxu0 %v732
  %781 = vmatprep.subr.mxu0 0.0
  %782 = vmatpush1.xpose.msra.mxu0 %v729
  %783 = vmatprep.subr.mxu0 0.0
  %784 = vmatpush1.xpose.msra.mxu0 %v726
  %785 = vmatprep.subr.mxu0 0.0
  %786 = vmatpush1.xpose.msra.mxu0 %v723
  %787 = vmatprep.subr.mxu0 0.0
  %788 = vmatpush1.xpose.msra.mxu0 %v720
  %789 = vmatprep.subr.mxu0 0.0
  %790 = vmatpush1.xpose.msra.mxu0 %v717
  %791 = vmatprep.subr.mxu0 0.0
  %792 = vmatpush1.xpose.msra.mxu0 %v714
  %793 = vmatprep.subr.mxu0 0.0
  %794 = vmatpush2.xpose.msra.mxu0 0.0
  %795 = vmatprep.subr.mxu0 0.0
  %796 = vmatpush2.xpose.msra.mxu0 0.0
  %797 = vmatprep.subr.mxu0 0.0
  %798 = vmatpush2.xpose.msra.mxu0 0.0
  %799 = vmatprep.subr.mxu0 0.0
  %800 = vmatpush2.xpose.msra.mxu0 0.0
  %801 = vmatprep.subr.mxu0 0.0
  %802 = vmatpush2.xpose.msra.mxu0 0.0
  %803 = vmatprep.subr.mxu0 0.0
  %804 = vmatpush2.xpose.msra.mxu0 0.0
  %805 = vmatprep.subr.mxu0 0.0
  %806 = vmatpush2.xpose.msra.mxu0 0.0
  %807 = vmatprep.subr.mxu0 0.0
  %808 = vmatpush2.xpose.msra.mxu0 0.0
  %809 = vmatprep.subr.mxu0 0.0
  %810 = vmatpush2.xpose.msra.mxu0 0.0
  %811 = vmatprep.subr.mxu0 0.0
  %812 = vmatpush2.xpose.msra.mxu0 0.0
  %813 = vmatprep.subr.mxu0 0.0
  %814 = vmatpush2.xpose.msra.mxu0 0.0
  %815 = vmatprep.subr.mxu0 0.0
  %816 = vmatpush2.xpose.msra.mxu0 0.0
  %817 = vmatprep.subr.mxu0 0.0
  %818 = vmatpush2.xpose.msra.mxu0 0.0
  %819 = vmatprep.subr.mxu0 0.0
  %820 = vmatpush2.xpose.msra.mxu0 0.0
  %821 = vmatprep.subr.mxu0 0.0
  %822 = vmatpush2.xpose.msra.mxu0 0.0
  %823 = vmatprep.subr.mxu0 0.0
  %824 = vmatpush2.xpose.msra.mxu0 0.0
  %825 = vmatprep.mubr.f32.mxu0 0.0
  %826 = vmatmul.mubr.f32.gmra.mxu0 %v702
  %v827 = vpop.f32.mrf.mxu0
  %v828 = vadd.f32 %v699, %v827
  %v829 = vpop.f32.mrf.mxu0
  %830 = vmatprep.mubr.f32.mxu0 0.0
  %831 = vmatmul.mubr.f32.gmra.mxu0 %v705
  %v832 = vpop.f32.mrf.mxu0
  %v833 = vadd.f32 %v699, %v832
  %v834 = vpop.f32.mrf.mxu0
  %835 = vmatprep.mubr.f32.mxu0 0.0
  %836 = vmatmul.mubr.f32.gmra.mxu0 %v708
  %v837 = vpop.f32.mrf.mxu0
  %v838 = vadd.f32 %v699, %v837
  %v839 = vpop.f32.mrf.mxu0
  %840 = vmatprep.mubr.f32.mxu0 0.0
  %841 = vmatmul.mubr.f32.gmra.mxu0 %v711
  %v842 = vpop.f32.mrf.mxu0
  %v843 = vadd.f32 %v699, %v842
  %v844 = vpop.f32.mrf.mxu0
  %845 = vdwg.mxu0
  %846 = vst [vmem:[%s6] sm:$0xff] %v828
  %847 = vst [vmem:[%s6 + $0x8] sm:$0xff] %v833
  %848 = vst [vmem:[%s6 + $0x10] sm:$0xff] %v838
  %849 = vst [vmem:[%s6 + $0x18] sm:$0xff] %v843
  // Predicated region
  $region26: #{lstm_wt_forward.1} parent=0 // pred_check
    _
  $region27: #{lstm_wt_forward.1} parent=0 // pred_check_branch
    %851 = sbr.rel (0) target = $region29
  $region28: #{lstm_wt_forward.1} parent=0 // pred_region
    _
  $region29: #{lstm_wt_forward.1} parent=0 // pred_fallthru
    _
  // Predicated region
  $region30: #{lstm_wt_forward.1} parent=0 // pred_check
    _
  $region31: #{lstm_wt_forward.1} parent=0 // pred_check_branch
    %853 = sbr.rel (0) target = $region33
  $region32: #{lstm_wt_forward.1} parent=0 // pred_region
    _
  $region33: #{lstm_wt_forward.1} parent=0 // pred_fallthru
    _

</llo_original>
